<compile_context>
chip_gen: v6e
topology: v6e:2x2x1
jax: 0.10.0
libtpu: 0.0.40
codegen_flags: <defaults>
</compile_context>

<pallas_src>
import functools

import jax
import jax.numpy as jnp
from jax import lax
from jax.experimental import pallas as pl
from jax.experimental.pallas import tpu as pltpu

_LANES = 128
_SUB = 8
_SUB_CHUNK_ROWS = 512          # rows per in-kernel reduction sub-chunk


def _cdiv(a, b):
    return -(-a // b)


def _round_up(a, b):
    return _cdiv(a, b) * b


def _round_down(a, b):
    return (a // b) * b


def _chip_config():
    """Static per-generation tuning (splits / tile bytes / VMEM limit)."""
    kind = ""
    try:
        kind = jax.devices()[0].device_kind.lower()
    except Exception:
        pass
    if "v7" in kind:                     # 2 TensorCores, 64 MiB VMEM/TC, 3.2 TB/s
        return {"splits": 2, "tile_bytes": 4 << 20, "vmem": 48 << 20,
                "core_parallel": True}
    if "v6" in kind or "trillium" in kind:   # 1 TC, 128 MiB VMEM, 1.4 TB/s
        return {"splits": 1, "tile_bytes": 4 << 20, "vmem": 32 << 20,
                "core_parallel": False}
    if "v5e" in kind or "v5 lite" in kind or "v5lite" in kind:
        return {"splits": 1, "tile_bytes": 2 << 20, "vmem": 24 << 20,
                "core_parallel": False}
    # Unknown chip: conservative defaults.
    return {"splits": 1, "tile_bytes": 2 << 20, "vmem": 32 << 20,
            "core_parallel": False}


def _sem_con_loss_kernel(h_ref, w_ref, s_ref, o_ref, *, tile_rows, sub_rows,
                         num_inner, valid_rows, needs_mask):
    c = pl.program_id(0)          # split (TensorCore) axis
    i = pl.program_id(1)          # inner (reduction) axis

    @pl.when(i == 0)
    def _():
        o_ref[...] = jnp.zeros((_SUB, _LANES), jnp.float32)

    # Global row offset of this (logical) block; static shapes, traced scalars.
    block_row0 = (c * num_inner + i) * tile_rows
    n_sub = tile_rows // sub_rows

    def body(k, acc):
        off = pl.multiple_of(k * sub_rows, sub_rows)
        # Widen on the VPU inside the kernel; HBM traffic stays native dtype.
        h = h_ref[pl.ds(off, sub_rows), :].astype(jnp.float32)
        w = w_ref[pl.ds(off, sub_rows), :].astype(jnp.float32)
        s = s_ref[pl.ds(off, sub_rows), :].astype(jnp.float32)
        diff = h - s
        val = w * jnp.abs(s) * diff * diff
        if needs_mask:
            # Ragged last block / clamped duplicate blocks: zero out rows that
            # lie beyond the valid stream (garbage-safe: where() selects 0).
            row_ids = (block_row0 + off
                       + lax.broadcasted_iota(jnp.int32, (sub_rows, _LANES), 0))
            val = jnp.where(row_ids < valid_rows, val, 0.0)
        # (sub_rows,128) -> (8,128) via lane-wise adds only (layout preserving).
        return acc + val.reshape(sub_rows // _SUB, _SUB, _LANES).sum(axis=0)

    acc = lax.fori_loop(0, n_sub, body,
                        jnp.zeros((_SUB, _LANES), jnp.float32), unroll=True)
    o_ref[...] += acc


@jax.jit
def sem_con_loss(H, W, S):
    """Pallas TPU implementation of SEM_CON_Loss.forward(H, W, S)."""
    assert H.shape == W.shape == S.shape, "H, W, S must share a shape"
    n0 = H.shape[0]                       # PyTorch divides by H.shape[0] ** 2
    total = int(H.size)
    cfg = _chip_config()

    itemsize = max(jnp.dtype(H.dtype).itemsize,
                   jnp.dtype(W.dtype).itemsize,
                   jnp.dtype(S.dtype).itemsize)

    rows_exact = total // _LANES
    zero_copy = (total % _LANES == 0) and (rows_exact >= _SUB)

    if zero_copy:
        # Free reshape of the original buffer — no extra HBM traffic at all.
        rows = rows_exact

        def stream(x):
            return x.reshape(rows, _LANES)
    else:
        # Only tiny / oddly-sized inputs reach here: pad the flattened stream
        # up to a whole number of (8,128) rows (zeros contribute 0).
        rows = max(_SUB, _round_up(_cdiv(total, _LANES), _SUB))
        pad = rows * _LANES - total

        def stream(x):
            xf = x.reshape(-1)
            if pad:
                xf = jnp.pad(xf, (0, pad))
            return xf.reshape(rows, _LANES)

    # Tile sizing: biggest lane-dense tile under the per-chip byte cap.
    cap_rows = max(_SUB, _round_down(cfg["tile_bytes"] // (_LANES * itemsize), _SUB))
    tile_rows = min(cap_rows, _round_down(rows, _SUB))
    if tile_rows >= _SUB_CHUNK_ROWS:
        tile_rows = _round_down(tile_rows, _SUB_CHUNK_ROWS)
        sub_rows = _SUB_CHUNK_ROWS
    else:
        sub_rows = tile_rows

    num_blocks = _cdiv(rows, tile_rows)
    num_splits = min(cfg["splits"], num_blocks)
    num_inner = _cdiv(num_blocks, num_splits)
    needs_mask = (num_splits * num_inner * tile_rows != rows)

    Hs, Ws, Ss = stream(H), stream(W), stream(S)

    if num_splits * num_inner == num_blocks:
        in_map = lambda c, i: (c * num_inner + i, 0)
    else:
        # At most (num_splits-1) trailing blocks are clamped to the last valid
        # block; their rows are >= `rows` so the in-kernel mask zeroes them.
        in_map = lambda c, i: (jnp.minimum(c * num_inner + i, num_blocks - 1), 0)

    kernel = functools.partial(
        _sem_con_loss_kernel, tile_rows=tile_rows, sub_rows=sub_rows,
        num_inner=num_inner, valid_rows=rows, needs_mask=needs_mask)

    out_rows = num_splits * _SUB
    cost = pl.CostEstimate(
        flops=6 * rows * _LANES,
        transcendentals=0,
        bytes_accessed=(Hs.size * Hs.dtype.itemsize
                        + Ws.size * Ws.dtype.itemsize
                        + Ss.size * Ss.dtype.itemsize
                        + out_rows * _LANES * 4),
    )

    if num_splits > 1 and cfg["core_parallel"]:
        # Engage both v7x TensorCores on the split axis.
        dims = (getattr(pltpu, "CORE_PARALLEL", "parallel"),
                getattr(pltpu, "ARBITRARY", "arbitrary"))
    else:
        dims = ("parallel", "arbitrary")

    block_spec = pl.BlockSpec((tile_rows, _LANES), in_map)
    out = pl.pallas_call(
        kernel,
        out_shape=jax.ShapeDtypeStruct((out_rows, _LANES), jnp.float32),
        grid_spec=pltpu.PrefetchScalarGridSpec(
            num_scalar_prefetch=0,
            grid=(num_splits, num_inner),
            in_specs=[block_spec, block_spec, block_spec],
            out_specs=pl.BlockSpec((_SUB, _LANES), lambda c, i: (c, 0)),
        ),
        compiler_params=pltpu.CompilerParams(
            dimension_semantics=dims,
            vmem_limit_bytes=cfg["vmem"],
        ),
        cost_estimate=cost,
    )(Hs, Ws, Ss)

    # Tiny (splits*8, 128) cross-lane reduce + final scale, fused in this jit.
    return out.sum() * (1.0 / float(n0 * n0))


def _reference(H, W, S):
    Hf = H.astype(jnp.float32)
    Wf = W.astype(jnp.float32)
    Sf = S.astype(jnp.float32)
    return (Wf * jnp.abs(Sf) * (Hf - Sf) ** 2).sum() / (H.shape[0] ** 2)


if __name__ == "__main__":
    key = jax.random.PRNGKey(0)
    keys = jax.random.split(key, 9)

    # Pairwise-similarity-style matrices [N, D]: zero-copy path, grid (1, 1).
    H = jax.random.normal(keys[0], (16, 128), dtype=jnp.float32)
    W = jax.random.uniform(keys[1], (16, 128), dtype=jnp.float32)
    S = jax.random.normal(keys[2], (16, 128), dtype=jnp.float32)
    loss = jax.block_until_ready(sem_con_loss(H, W, S))
    ref = _reference(H, W, S)
    assert jnp.allclose(loss, ref, rtol=1e-5, atol=1e-5), (loss, ref)

    # Non-multiple-of-8 row count: exercises the ragged last block + row mask.
    H2 = jax.random.normal(keys[3], (20, 128), dtype=jnp.float32)
    W2 = jax.random.uniform(keys[4], (20, 128), dtype=jnp.float32)
    S2 = jax.random.normal(keys[5], (20, 128), dtype=jnp.float32)
    loss2 = jax.block_until_ready(sem_con_loss(H2, W2, S2))
    ref2 = _reference(H2, W2, S2)
    assert jnp.allclose(loss2, ref2, rtol=1e-5, atol=1e-5), (loss2, ref2)

    # Awkward small shape (total not a multiple of 128): tiny pad path.
    H3 = jax.random.normal(keys[6], (10, 33), dtype=jnp.float32)
    W3 = jax.random.uniform(keys[7], (10, 33), dtype=jnp.float32)
    S3 = jax.random.normal(keys[8], (10, 33), dtype=jnp.float32)
    loss3 = jax.block_until_ready(sem_con_loss(H3, W3, S3))
    ref3 = _reference(H3, W3, S3)
    assert jnp.allclose(loss3, ref3, rtol=1e-5, atol=1e-5), (loss3, ref3)

    print("KERNEL_OK")
</pallas_src>

<mosaic_0001>
module attributes {stable_mosaic.version = 11 : i64} {
  func.func @_sem_con_loss_kernel(%arg0: i32, %arg1: i32, %arg2: memref<16x128xf32, #tpu.memory_space<vmem>>, %arg3: memref<16x128xf32, #tpu.memory_space<vmem>>, %arg4: memref<16x128xf32, #tpu.memory_space<vmem>>, %arg5: memref<8x128xf32, #tpu.memory_space<vmem>>) attributes {dimension_semantics = [#tpu.dimension_semantics<parallel>, #tpu.dimension_semantics<arbitrary>], iteration_bounds = array<i64: 1, 1>, scalar_prefetch = 0 : i64, scratch_operands = 0 : i64, tpu.core_type = #tpu.core_type<tc>, window_params = [{transform_indices = @transform_0, window_bounds = array<i64: 16, 128>}, {transform_indices = @transform_1, window_bounds = array<i64: 16, 128>}, {transform_indices = @transform_2, window_bounds = array<i64: 16, 128>}, {transform_indices = @transform_3, window_bounds = array<i64: 8, 128>}]} {
    %c0_i32 = arith.constant 0 : i32
    %0 = arith.cmpi eq, %arg1, %c0_i32 : i32
    %1 = arith.extui %0 : i1 to i32
    %c0_i32_0 = arith.constant 0 : i32
    %2 = arith.cmpi ne, %1, %c0_i32_0 : i32
    scf.if %2 {
      %cst_9 = arith.constant 0.000000e+00 : f32
      %23 = vector.broadcast %cst_9 : f32 to vector<8x128xf32>
      %c0_10 = arith.constant 0 : index
      %c0_11 = arith.constant 0 : index
      %24 = vector.load %arg5[%c0_10, %c0_11] : memref<8x128xf32, #tpu.memory_space<vmem>>, vector<8x128xf32>
      tpu.vector_store %arg5[%c0_10, %c0_11], %23 {strides = array<i32>} : memref<8x128xf32, #tpu.memory_space<vmem>>, vector<8x128xf32>,
    } else {
    }
    %cst = arith.constant 0.000000e+00 : f32
    %3 = vector.broadcast %cst : f32 to vector<8x128xf32>
    %c0_i32_1 = arith.constant 0 : i32
    %c16_i32 = arith.constant 16 : i32
    %4 = arith.muli %c0_i32_1, %c16_i32 : i32
    %5 = tpu.assume_multiple %4, 16 : i32
    %6 = arith.index_cast %5 : i32 to index
    %c0 = arith.constant 0 : index
    %7 = vector.load %arg2[%6, %c0] : memref<16x128xf32, #tpu.memory_space<vmem>>, vector<16x128xf32>
    %8 = arith.index_cast %5 : i32 to index
    %c0_2 = arith.constant 0 : index
    %9 = vector.load %arg3[%8, %c0_2] : memref<16x128xf32, #tpu.memory_space<vmem>>, vector<16x128xf32>
    %10 = arith.index_cast %5 : i32 to index
    %c0_3 = arith.constant 0 : index
    %11 = vector.load %arg4[%10, %c0_3] : memref<16x128xf32, #tpu.memory_space<vmem>>, vector<16x128xf32>
    %12 = arith.subf %7, %11 : vector<16x128xf32>
    %13 = math.absf %11 : vector<16x128xf32>
    %14 = arith.mulf %9, %13 : vector<16x128xf32>
    %15 = arith.mulf %14, %12 : vector<16x128xf32>
    %16 = arith.mulf %15, %12 : vector<16x128xf32>
    %17 = vector.shape_cast %16 : vector<16x128xf32> to vector<2x8x128xf32>
    %cst_4 = arith.constant dense<0.000000e+00> : vector<8x128xf32>
    %18 = vector.multi_reduction <add>, %17, %cst_4 [0] : vector<2x8x128xf32> to vector<8x128xf32>
    %19 = arith.addf %3, %18 : vector<8x128xf32>
    %c1_i32 = arith.constant 1 : i32
    %c0_5 = arith.constant 0 : index
    %c0_6 = arith.constant 0 : index
    %20 = vector.load %arg5[%c0_5, %c0_6] : memref<8x128xf32, #tpu.memory_space<vmem>>, vector<8x128xf32>
    %21 = arith.addf %20, %19 : vector<8x128xf32>
    %c0_7 = arith.constant 0 : index
    %c0_8 = arith.constant 0 : index
    %22 = vector.load %arg5[%c0_7, %c0_8] : memref<8x128xf32, #tpu.memory_space<vmem>>, vector<8x128xf32>
    tpu.vector_store %arg5[%c0_7, %c0_8], %21 {strides = array<i32>} : memref<8x128xf32, #tpu.memory_space<vmem>>, vector<8x128xf32>,
    return
  }
  func.func @transform_0(%arg0: i32, %arg1: i32) -> (i32, i32) {
    %c1_i32 = arith.constant 1 : i32
    %0 = arith.muli %arg0, %c1_i32 : i32
    %1 = arith.addi %0, %arg1 : i32
    %c0_i32 = arith.constant 0 : i32
    %c0_i32_0 = arith.constant 0 : i32
    return %1, %c0_i32 : i32, i32
  }
  func.func @transform_1(%arg0: i32, %arg1: i32) -> (i32, i32) {
    %c1_i32 = arith.constant 1 : i32
    %0 = arith.muli %arg0, %c1_i32 : i32
    %1 = arith.addi %0, %arg1 : i32
    %c0_i32 = arith.constant 0 : i32
    %c0_i32_0 = arith.constant 0 : i32
    return %1, %c0_i32 : i32, i32
  }
  func.func @transform_2(%arg0: i32, %arg1: i32) -> (i32, i32) {
    %c1_i32 = arith.constant 1 : i32
    %0 = arith.muli %arg0, %c1_i32 : i32
    %1 = arith.addi %0, %arg1 : i32
    %c0_i32 = arith.constant 0 : i32
    %c0_i32_0 = arith.constant 0 : i32
    return %1, %c0_i32 : i32, i32
  }
  func.func @transform_3(%arg0: i32, %arg1: i32) -> (i32, i32) {
    %c0_i32 = arith.constant 0 : i32
    %c0_i32_0 = arith.constant 0 : i32
    return %arg0, %c0_i32 : i32, i32
  }
}

</mosaic_0001>

<llo_original>
// kernel: sem_con_loss.1
$region0: #{sem_con_loss.1}
  #allocation0 [shape = 'u32[]', space=smem, size = 0x4, offset = 0x4, fixed_abs, tag = 'smem constant byte address 0x4 - core index']
  #allocation1 [shape = 'u32[144,128]{1,0:T(1,128)}', space=vmem, size = 0x12000, scoped, tag = 'internal scratch']
  %s0 = inlined_call_operand.hbm [shape: f32[16,128], index: 0, kind: input, shape index: {}]
  %s1 = inlined_call_operand.hbm [shape: f32[16,128], index: 1, kind: input, shape index: {}]
  %s2 = inlined_call_operand.hbm [shape: f32[16,128], index: 2, kind: input, shape index: {}]
  %s3 = inlined_call_operand.vmem [shape: f32[8,128], index: 3, kind: output, shape index: {}]
  %s4 = sld [smem:[#allocation0]]
  $region38: #{sem_con_loss.1} parent=0
    _
  %s6 = ssub.s32 1, %s4
  %s7 = scalar_select 0, %s6, %s4
  $region1: #{sem_con_loss.1} parent=0
    #allocation2 [shape = 'u8[8192]{0}', space=vmem, size = 0x2000, scoped, tag = 'input window, operand 0, single buffered']
    #allocation3 [shape = 's32[1]{0}', space=sflag, size = 0x4, scoped, tag = 'scoped memory for sem_con_loss.1']
    #allocation4 [shape = 'u8[8192]{0}', space=vmem, size = 0x2000, scoped, tag = 'input window, operand 1, single buffered']
    #allocation5 [shape = 's32[1]{0}', space=sflag, size = 0x4, scoped, tag = 'scoped memory for sem_con_loss.1']
    #allocation6 [shape = 'u8[8192]{0}', space=vmem, size = 0x2000, scoped, tag = 'input window, operand 2, single buffered']
    %8 = vsyncpa [#allocation3], 0
    %9 = vsyncpa [#allocation5], 0
    // Predicated region
    $region2: #{sem_con_loss.1} parent=1 // pred_check
      _
    $region3: #{sem_con_loss.1} parent=1 // pred_check_branch
      %11 = sbr.rel (0) target = $region5
    $region4: #{sem_con_loss.1} parent=1 // pred_region
      %s12 = sadd.s32 0, 0
      %s13 = smul.u32 2, %s12
      %s15 = ssub.s32 256, 256
      %16 = vsyncadd [#allocation3], %s15
      %s17 = smul.addr %s13, 128
      %s18 = scalar_lea.hbm %s0, %s17
      %s19 = sshll.u32 [#allocation2], 4
      %s20 = int_to_ptr.vmem [resolvable:$true] %s19
      %25 = dma.hbm_to_vmem [thread:$0]  %s18, 256, %s20, [#allocation3], 128, 128, 8
    $region5: #{sem_con_loss.1} parent=1 // pred_fallthru
      _
    // Predicated region
    $region6: #{sem_con_loss.1} parent=1 // pred_check
      _
    $region7: #{sem_con_loss.1} parent=1 // pred_check_branch
      %27 = sbr.rel (0) target = $region9
    $region8: #{sem_con_loss.1} parent=1 // pred_region
      %s28 = sadd.s32 0, 0
      %s29 = smul.u32 2, %s28
      %s31 = ssub.s32 256, 256
      %32 = vsyncadd [#allocation5], %s31
      %s33 = smul.addr %s29, 128
      %s34 = scalar_lea.hbm %s1, %s33
      %s35 = sshll.u32 [#allocation4], 4
      %s36 = int_to_ptr.vmem [resolvable:$true] %s35
      %41 = dma.hbm_to_vmem [thread:$0]  %s34, 256, %s36, [#allocation5], 128, 128, 8
    $region9: #{sem_con_loss.1} parent=1 // pred_fallthru
      _
    // Predicated region
    $region10: #{sem_con_loss.1} parent=1 // pred_check
      _
    $region11: #{sem_con_loss.1} parent=1 // pred_check_branch
      %43 = sbr.rel (0) target = $region13
    $region12: #{sem_con_loss.1} parent=1 // pred_region
      %s44 = sadd.s32 0, 0
      %s45 = smul.u32 2, %s44
      %s47 = ssub.s32 256, 256
      %48 = vsyncadd [#allocation5], %s47
      %s49 = smul.addr %s45, 128
      %s50 = scalar_lea.hbm %s2, %s49
      %s51 = sshll.u32 [#allocation6], 4
      %s52 = int_to_ptr.vmem [resolvable:$true] %s51
      %57 = dma.hbm_to_vmem [thread:$0]  %s50, 256, %s52, [#allocation5], 128, 128, 8
    $region13: #{sem_con_loss.1} parent=1 // pred_fallthru
      _
    // Predicated region
    $region14: #{sem_con_loss.1} parent=1 // pred_check
      _
    $region15: #{sem_con_loss.1} parent=1 // pred_check_branch
      %59 = sbr.rel (0) target = $region17
    $region16: #{sem_con_loss.1} parent=1 // pred_region
      %60 = dma.done [#allocation3], 256
    $region17: #{sem_con_loss.1} parent=1 // pred_fallthru
      _
    // Predicated region
    $region18: #{sem_con_loss.1} parent=1 // pred_check
      _
    $region19: #{sem_con_loss.1} parent=1 // pred_check_branch
      %62 = sbr.rel (0) target = $region21
    $region20: #{sem_con_loss.1} parent=1 // pred_region
      %63 = dma.done [#allocation5], 256
    $region21: #{sem_con_loss.1} parent=1 // pred_fallthru
      _
    // Predicated region
    $region22: #{sem_con_loss.1} parent=1 // pred_check
      _
    $region23: #{sem_con_loss.1} parent=1 // pred_check_branch
      %65 = sbr.rel (0) target = $region25
    $region24: #{sem_con_loss.1} parent=1 // pred_region
      %66 = dma.done [#allocation5], 256
    $region25: #{sem_con_loss.1} parent=1 // pred_fallthru
      _
    %s67 = sadd.s32 0, 0
    %s68 = smul.u32 2, %s67
    %s69 = sadd.s32 0, 0
    %s70 = smul.u32 2, %s69
    %s71 = sadd.s32 0, 0
    %s72 = smul.u32 2, %s71
    %p73 = scmp.eq.s32.totalorder 0, 0
    // Predicated region
    $region26: #{sem_con_loss.1} parent=1 // pred_check
      %p74 = pneg %p73
    $region27: #{sem_con_loss.1} parent=1 // pred_check_branch
      %76 = sbr.rel (%p74) target = $region29
    $region28: #{sem_con_loss.1} parent=1 // pred_region
      %77 = vst [vmem:[%s3] sm:$0xff] 0.0
    $region29: #{sem_con_loss.1} parent=1 // pred_fallthru
      _
    %v78 = vld [vmem:[#allocation2] sm:$0xff]
    %v79 = vld [vmem:[#allocation2 + $0x8] sm:$0xff]
    %v80 = vld [vmem:[#allocation4] sm:$0xff]
    %v81 = vld [vmem:[#allocation4 + $0x8] sm:$0xff]
    %v82 = vld [vmem:[#allocation6] sm:$0xff]
    %v83 = vld [vmem:[#allocation6 + $0x8] sm:$0xff]
    %v84 = vsub.f32 %v78, %v82
    %v85 = vsub.f32 %v79, %v83
    %v86 = vand.u32 2147483647, %v82
    %v87 = vand.u32 2147483647, %v83
    %v88 = vmul.f32 %v80, %v86
    %v89 = vmul.f32 %v81, %v87
    %v90 = vmul.f32 %v88, %v84
    %v91 = vmul.f32 %v89, %v85
    %v92 = vmul.f32 %v90, %v84
    %v93 = vmul.f32 %v91, %v85
    %v94 = vadd.f32 %v92, %v93
    %v95 = vadd.f32 %v94, 0.0
    %v96 = vld [vmem:[%s3] sm:$0xff]
    %v97 = vadd.f32 %v96, %v95
    %98 = vst [vmem:[%s3] sm:$0xff] %v97
    // Predicated region
    $region30: #{sem_con_loss.1} parent=1 // pred_check
      _
    $region31: #{sem_con_loss.1} parent=1 // pred_check_branch
      %100 = sbr.rel (0) target = $region33
    $region32: #{sem_con_loss.1} parent=1 // pred_region
      _
    $region33: #{sem_con_loss.1} parent=1 // pred_fallthru
      _
    // Predicated region
    $region34: #{sem_con_loss.1} parent=1 // pred_check
      _
    $region35: #{sem_con_loss.1} parent=1 // pred_check_branch
      %102 = sbr.rel (0) target = $region37
    $region36: #{sem_con_loss.1} parent=1 // pred_region
      _
    $region37: #{sem_con_loss.1} parent=1 // pred_fallthru
      _
    %103 = vsyncpa [#allocation3], 1
    %104 = vsyncpa [#allocation5], 1

</llo_original>
